<compile_context>
chip_gen: v5e
topology: v5e:2x2
jax: 0.10.0
libtpu: 0.0.40
codegen_flags: <defaults>
</compile_context>

<pallas_src>
import functools

import jax
import jax.numpy as jnp
from jax.experimental import pallas as pl
from jax.experimental.pallas import tpu as pltpu

MAX_SENT_LEN = 42


# ----------------------------- Pallas kernel -------------------------------


def decoder_step_kernel(x_ref, h0_ref, wih_ref, whh_ref, bi_ref, bh_ref,
                        wout_ref, bout_ref, logp_ref, hout_ref, *, n_layers):
    """relu -> GRU (reused n_layers times) -> Linear -> log_softmax."""
    # x_ref:    (BT, H)   embedded tokens (bf16)
    # h0_ref:   (BT, H)   incoming hidden state (f32)
    # wih_ref:  (H, 3H)   W_ih.T, gates [r|z|n] (bf16)
    # whh_ref:  (H, 3H)   W_hh.T, gates [r|z|n] (bf16)
    # bi_ref:   (1, 3H)   b_ih (f32)
    # bh_ref:   (1, 3H)   b_hh (f32)
    # wout_ref: (H, V)    W_out.T (f32)
    # bout_ref: (1, V)    b_out (f32)
    # logp_ref: (BT, V)   log-probabilities (f32)
    # hout_ref: (BT, H)   new hidden state (f32)
    H = hout_ref.shape[-1]

    x = x_ref[...]                               # bf16
    h = h0_ref[...]                              # f32
    for _ in range(n_layers):                    # static unroll (n_layers=2)
        xr = jnp.maximum(x, 0.0).astype(jnp.bfloat16)      # F.relu(output)
        # gate pre-activations on the MXU; refs indexed at the call site so
        # Mosaic streams operands from VMEM (no 256 KiB vreg residency).
        gi = jnp.dot(xr, wih_ref[...],
                     preferred_element_type=jnp.float32) + bi_ref[...]
        gh = jnp.dot(h.astype(jnp.bfloat16), whh_ref[...],
                     preferred_element_type=jnp.float32) + bh_ref[...]
        r = jax.nn.sigmoid(gi[:, 0:H] + gh[:, 0:H])
        z = jax.nn.sigmoid(gi[:, H:2 * H] + gh[:, H:2 * H])
        n = jnp.tanh(gi[:, 2 * H:3 * H] + r * gh[:, 2 * H:3 * H])
        h = (1.0 - z) * n + z * h                # GRU hidden update (f32)
        x = h                                    # gru output == hidden (seq_len 1)

    # self.out(output[0]) followed by log_softmax(dim=1)   (f32 projection)
    logits = jnp.dot(h, wout_ref[...],
                     preferred_element_type=jnp.float32) + bout_ref[...]
    m = jnp.max(logits, axis=-1, keepdims=True)
    s = logits - m
    lse = jnp.log(jnp.sum(jnp.exp(s), axis=-1, keepdims=True))
    logp_ref[...] = (s - lse).astype(logp_ref.dtype)
    hout_ref[...] = h.astype(hout_ref.dtype)


# ------------------------ one-time parameter prep ---------------------------


def prepare_decoder_params(params):
    """Hoisted out of the decode loop: transposes / casts / bias reshapes."""
    H = params["w_ih"].shape[1]
    V = params["out_w"].shape[0]
    return dict(
        emb=params["embedding"].astype(jnp.bfloat16),          # (V, H)
        wih_t=params["w_ih"].T.astype(jnp.bfloat16),            # (H, 3H)
        whh_t=params["w_hh"].T.astype(jnp.bfloat16),            # (H, 3H)
        bi=params["b_ih"].reshape(1, 3 * H).astype(jnp.float32),
        bh=params["b_hh"].reshape(1, 3 * H).astype(jnp.float32),
        wout_t=params["out_w"].T.astype(jnp.float32),           # (H, V) f32
        bo=params["out_b"].reshape(1, V).astype(jnp.float32),
    )


# ------------------------------- wrapper ------------------------------------


def decoder_forward(tokens, hidden, encoder_outputs, prepped, n_layers=2):
    """Reproduces Decoder.forward(input, hidden, encoder_outputs)."""
    del encoder_outputs                         # unused by the PyTorch forward
    ids = tokens.reshape(-1)                    # input.view(1, -1) -> seq_len=1
    B = ids.shape[0]
    emb = prepped["emb"]                        # (V, H) bf16
    H = emb.shape[1]
    V = prepped["wout_t"].shape[1]

    # embedding(input).view(1, batch, -1)[0]  (tiny gather, left to XLA)
    x = jnp.take(emb, ids, axis=0)                           # (B, H) bf16
    h0 = hidden[0].astype(jnp.float32)                       # (B, H)

    # single grid step for small batches; large batches shard in 256-row
    # "parallel" tiles (only worth it when each core gets >= ~256 rows).
    if B > 256 and B % 256 == 0:
        BT, semantics = 256, ("parallel",)
    else:
        BT, semantics = B, ("arbitrary",)
    grid = (B // BT,)

    kernel = functools.partial(decoder_step_kernel, n_layers=n_layers)

    logp, h_out = pl.pallas_call(
        kernel,
        out_shape=(jax.ShapeDtypeStruct((B, V), jnp.float32),
                   jax.ShapeDtypeStruct((B, H), jnp.float32)),
        grid=grid,
        in_specs=[
            pl.BlockSpec((BT, H), lambda i: (i, 0)),        # x (batch tile)
            pl.BlockSpec((BT, H), lambda i: (i, 0)),        # h0 (batch tile)
            pl.BlockSpec((H, 3 * H), lambda i: (0, 0)),     # W_ih.T (resident)
            pl.BlockSpec((H, 3 * H), lambda i: (0, 0)),     # W_hh.T (resident)
            pl.BlockSpec((1, 3 * H), lambda i: (0, 0)),     # b_ih
            pl.BlockSpec((1, 3 * H), lambda i: (0, 0)),     # b_hh
            pl.BlockSpec((H, V), lambda i: (0, 0)),         # W_out.T (resident)
            pl.BlockSpec((1, V), lambda i: (0, 0)),         # b_out
        ],
        out_specs=(
            pl.BlockSpec((BT, V), lambda i: (i, 0)),        # log-probs
            pl.BlockSpec((BT, H), lambda i: (i, 0)),        # new hidden
        ),
        compiler_params=pltpu.CompilerParams(
            dimension_semantics=semantics),
    )(x, h0, prepped["wih_t"], prepped["whh_t"], prepped["bi"],
      prepped["bh"], prepped["wout_t"], prepped["bo"])

    return logp, h_out[None, :, :]              # hidden: (1, batch, hidden)


# ------------------------- pure-JAX reference (f32) -------------------------


def decoder_forward_ref(tokens, hidden, params, n_layers=2):
    ids = tokens.reshape(-1)
    x = jnp.take(params["embedding"], ids, axis=0)
    h = hidden[0]
    H = h.shape[-1]
    for _ in range(n_layers):
        xr = jnp.maximum(x, 0.0)
        gi = xr @ params["w_ih"].T + params["b_ih"]
        gh = h @ params["w_hh"].T + params["b_hh"]
        r = jax.nn.sigmoid(gi[:, :H] + gh[:, :H])
        z = jax.nn.sigmoid(gi[:, H:2 * H] + gh[:, H:2 * H])
        n = jnp.tanh(gi[:, 2 * H:] + r * gh[:, 2 * H:])
        h = (1.0 - z) * n + z * h
        x = h
    logits = h @ params["out_w"].T + params["out_b"]
    return jax.nn.log_softmax(logits, axis=-1), h[None, :, :]


# --------------------------- deterministic params ---------------------------


def init_params(key, hidden_size, output_size):
    """Mimics nn.Embedding / nn.GRU / nn.Linear default initialisation."""
    H, V = hidden_size, output_size
    ks = jax.random.split(key, 7)
    bound = 1.0 / float(H) ** 0.5
    emb = jax.random.normal(ks[0], (V, H), jnp.float32)
    w_ih = jax.random.uniform(ks[1], (3 * H, H), jnp.float32, -bound, bound)
    w_hh = jax.random.uniform(ks[2], (3 * H, H), jnp.float32, -bound, bound)
    b_ih = jax.random.uniform(ks[3], (3 * H,), jnp.float32, -bound, bound)
    b_hh = jax.random.uniform(ks[4], (3 * H,), jnp.float32, -bound, bound)
    out_w = jax.random.uniform(ks[5], (V, H), jnp.float32, -bound, bound)
    out_b = jax.random.uniform(ks[6], (V,), jnp.float32, -bound, bound)
    return dict(embedding=emb, w_ih=w_ih, w_hh=w_hh, b_ih=b_ih, b_hh=b_hh,
                out_w=out_w, out_b=out_b)


if __name__ == "__main__":
    key = jax.random.PRNGKey(0)

    hidden_size = 128     # multiple of 128: lane-dense matmuls & stores
    output_size = 256     # vocab; multiple of 128: lane-dense log-softmax slab
    batch = 16            # one grid step, bf16-sublane-aligned batch tile
    n_layers = 2
    max_length = MAX_SENT_LEN

    kp, kt, kh = jax.random.split(key, 3)
    params = init_params(kp, hidden_size, output_size)
    prepped = prepare_decoder_params(params)    # one-time, outside decode loop

    tokens = jax.random.randint(kt, (1, batch), 0, output_size, dtype=jnp.int32)
    hidden0 = jax.random.normal(kh, (1, batch, hidden_size), jnp.float32)
    # encoder_outputs is part of the forward signature but unused by its body.
    encoder_outputs = jnp.zeros((max_length, batch, hidden_size), jnp.float32)

    output, hidden = decoder_forward(tokens, hidden0, encoder_outputs, prepped,
                                     n_layers=n_layers)
    jax.block_until_ready((output, hidden))

    assert output.shape == (batch, output_size)
    assert hidden.shape == (1, batch, hidden_size)

    # correctness check against a pure-JAX f32 reference (loose tolerance for
    # the bf16 embedding / bf16 gate-matmul operands)
    ref_out, ref_hid = decoder_forward_ref(tokens, hidden0, params, n_layers)
    assert jnp.allclose(output, ref_out, atol=7e-2, rtol=7e-2)
    assert jnp.allclose(hidden, ref_hid, atol=7e-2, rtol=7e-2)

    print("KERNEL_OK")
</pallas_src>

<mosaic_0001>
module attributes {stable_mosaic.version = 11 : i64} {
  func.func @decoder_step_kernel(%arg0: i32, %arg1: memref<16x128xbf16, #tpu.memory_space<vmem>>, %arg2: memref<16x128xf32, #tpu.memory_space<vmem>>, %arg3: memref<128x384xbf16, #tpu.memory_space<vmem>>, %arg4: memref<128x384xbf16, #tpu.memory_space<vmem>>, %arg5: memref<1x384xf32, #tpu.memory_space<vmem>>, %arg6: memref<1x384xf32, #tpu.memory_space<vmem>>, %arg7: memref<128x256xf32, #tpu.memory_space<vmem>>, %arg8: memref<1x256xf32, #tpu.memory_space<vmem>>, %arg9: memref<16x256xf32, #tpu.memory_space<vmem>>, %arg10: memref<16x128xf32, #tpu.memory_space<vmem>>) attributes {dimension_semantics = [#tpu.dimension_semantics<arbitrary>], iteration_bounds = array<i64: 1>, scalar_prefetch = 0 : i64, scratch_operands = 0 : i64, tpu.core_type = #tpu.core_type<tc>, window_params = [{transform_indices = @transform_0, window_bounds = array<i64: 16, 128>}, {transform_indices = @transform_1, window_bounds = array<i64: 16, 128>}, {pipeline_mode = #tpu.pipeline_mode<synchronous>, transform_indices = @transform_2, window_bounds = array<i64: 128, 384>}, {pipeline_mode = #tpu.pipeline_mode<synchronous>, transform_indices = @transform_3, window_bounds = array<i64: 128, 384>}, {pipeline_mode = #tpu.pipeline_mode<synchronous>, transform_indices = @transform_4, window_bounds = array<i64: 1, 384>}, {pipeline_mode = #tpu.pipeline_mode<synchronous>, transform_indices = @transform_5, window_bounds = array<i64: 1, 384>}, {pipeline_mode = #tpu.pipeline_mode<synchronous>, transform_indices = @transform_6, window_bounds = array<i64: 128, 256>}, {pipeline_mode = #tpu.pipeline_mode<synchronous>, transform_indices = @transform_7, window_bounds = array<i64: 1, 256>}, {transform_indices = @transform_8, window_bounds = array<i64: 16, 256>}, {transform_indices = @transform_9, window_bounds = array<i64: 16, 128>}]} {
    %c0 = arith.constant 0 : index
    %c0_0 = arith.constant 0 : index
    %0 = vector.load %arg1[%c0, %c0_0] : memref<16x128xbf16, #tpu.memory_space<vmem>>, vector<16x128xbf16>
    %c0_1 = arith.constant 0 : index
    %c0_2 = arith.constant 0 : index
    %1 = vector.load %arg2[%c0_1, %c0_2] : memref<16x128xf32, #tpu.memory_space<vmem>>, vector<16x128xf32>
    %cst = arith.constant 0.000000e+00 : bf16
    %2 = vector.broadcast %cst : bf16 to vector<16x128xbf16>
    %3 = arith.maximumf %0, %2 : vector<16x128xbf16>
    %c0_3 = arith.constant 0 : index
    %c0_4 = arith.constant 0 : index
    %4 = vector.load %arg3[%c0_3, %c0_4] : memref<128x384xbf16, #tpu.memory_space<vmem>>, vector<128x384xbf16>
    %cst_5 = arith.constant dense<0.000000e+00> : vector<16x384xf32>
    %5 = tpu.matmul %3, %4, %cst_5 {dimension_numbers = #tpu.dot_dimension_numbers<[1], [0], [0], [1], [0, 0, 1, 1], [], []>} : vector<16x128xbf16>, vector<128x384xbf16>, vector<16x384xf32> -> vector<16x384xf32>
    %c0_6 = arith.constant 0 : index
    %c0_7 = arith.constant 0 : index
    %6 = vector.load %arg5[%c0_6, %c0_7] : memref<1x384xf32, #tpu.memory_space<vmem>>, vector<1x384xf32>
    %7 = vector.broadcast %6 : vector<1x384xf32> to vector<16x384xf32>
    %8 = arith.addf %5, %7 : vector<16x384xf32>
    %9 = arith.truncf %1 : vector<16x128xf32> to vector<16x128xbf16>
    %c0_8 = arith.constant 0 : index
    %c0_9 = arith.constant 0 : index
    %10 = vector.load %arg4[%c0_8, %c0_9] : memref<128x384xbf16, #tpu.memory_space<vmem>>, vector<128x384xbf16>
    %cst_10 = arith.constant dense<0.000000e+00> : vector<16x384xf32>
    %11 = tpu.matmul %9, %10, %cst_10 {dimension_numbers = #tpu.dot_dimension_numbers<[1], [0], [0], [1], [0, 0, 1, 1], [], []>} : vector<16x128xbf16>, vector<128x384xbf16>, vector<16x384xf32> -> vector<16x384xf32>
    %c0_11 = arith.constant 0 : index
    %c0_12 = arith.constant 0 : index
    %12 = vector.load %arg6[%c0_11, %c0_12] : memref<1x384xf32, #tpu.memory_space<vmem>>, vector<1x384xf32>
    %13 = vector.broadcast %12 : vector<1x384xf32> to vector<16x384xf32>
    %14 = arith.addf %11, %13 : vector<16x384xf32>
    %15 = vector.extract_strided_slice %8 {offsets = [0, 0], sizes = [16, 128], strides = [1, 1]} : vector<16x384xf32> to vector<16x128xf32>
    %16 = vector.extract_strided_slice %14 {offsets = [0, 0], sizes = [16, 128], strides = [1, 1]} : vector<16x384xf32> to vector<16x128xf32>
    %17 = arith.addf %15, %16 : vector<16x128xf32>
    %18 = arith.negf %17 : vector<16x128xf32>
    %19 = math.exp %18 : vector<16x128xf32>
    %cst_13 = arith.constant 1.000000e+00 : f32
    %20 = vector.broadcast %cst_13 : f32 to vector<16x128xf32>
    %21 = arith.addf %20, %19 : vector<16x128xf32>
    %22 = arith.divf %20, %21 : vector<16x128xf32>
    %23 = vector.extract_strided_slice %8 {offsets = [0, 128], sizes = [16, 128], strides = [1, 1]} : vector<16x384xf32> to vector<16x128xf32>
    %24 = vector.extract_strided_slice %14 {offsets = [0, 128], sizes = [16, 128], strides = [1, 1]} : vector<16x384xf32> to vector<16x128xf32>
    %25 = arith.addf %23, %24 : vector<16x128xf32>
    %26 = arith.negf %25 : vector<16x128xf32>
    %27 = math.exp %26 : vector<16x128xf32>
    %cst_14 = arith.constant 1.000000e+00 : f32
    %28 = vector.broadcast %cst_14 : f32 to vector<16x128xf32>
    %29 = arith.addf %28, %27 : vector<16x128xf32>
    %30 = arith.divf %28, %29 : vector<16x128xf32>
    %31 = vector.extract_strided_slice %8 {offsets = [0, 256], sizes = [16, 128], strides = [1, 1]} : vector<16x384xf32> to vector<16x128xf32>
    %32 = vector.extract_strided_slice %14 {offsets = [0, 256], sizes = [16, 128], strides = [1, 1]} : vector<16x384xf32> to vector<16x128xf32>
    %33 = arith.mulf %22, %32 : vector<16x128xf32>
    %34 = arith.addf %31, %33 : vector<16x128xf32>
    %35 = math.tanh %34 : vector<16x128xf32>
    %cst_15 = arith.constant 1.000000e+00 : f32
    %36 = vector.broadcast %cst_15 : f32 to vector<16x128xf32>
    %37 = arith.subf %36, %30 : vector<16x128xf32>
    %38 = arith.mulf %37, %35 : vector<16x128xf32>
    %39 = arith.mulf %30, %1 : vector<16x128xf32>
    %40 = arith.addf %38, %39 : vector<16x128xf32>
    %cst_16 = arith.constant 0.000000e+00 : f32
    %41 = vector.broadcast %cst_16 : f32 to vector<16x128xf32>
    %42 = arith.maximumf %40, %41 : vector<16x128xf32>
    %43 = arith.truncf %42 : vector<16x128xf32> to vector<16x128xbf16>
    %c0_17 = arith.constant 0 : index
    %c0_18 = arith.constant 0 : index
    %44 = vector.load %arg3[%c0_17, %c0_18] : memref<128x384xbf16, #tpu.memory_space<vmem>>, vector<128x384xbf16>
    %cst_19 = arith.constant dense<0.000000e+00> : vector<16x384xf32>
    %45 = tpu.matmul %43, %44, %cst_19 {dimension_numbers = #tpu.dot_dimension_numbers<[1], [0], [0], [1], [0, 0, 1, 1], [], []>} : vector<16x128xbf16>, vector<128x384xbf16>, vector<16x384xf32> -> vector<16x384xf32>
    %c0_20 = arith.constant 0 : index
    %c0_21 = arith.constant 0 : index
    %46 = vector.load %arg5[%c0_20, %c0_21] : memref<1x384xf32, #tpu.memory_space<vmem>>, vector<1x384xf32>
    %47 = vector.broadcast %46 : vector<1x384xf32> to vector<16x384xf32>
    %48 = arith.addf %45, %47 : vector<16x384xf32>
    %49 = arith.truncf %40 : vector<16x128xf32> to vector<16x128xbf16>
    %c0_22 = arith.constant 0 : index
    %c0_23 = arith.constant 0 : index
    %50 = vector.load %arg4[%c0_22, %c0_23] : memref<128x384xbf16, #tpu.memory_space<vmem>>, vector<128x384xbf16>
    %cst_24 = arith.constant dense<0.000000e+00> : vector<16x384xf32>
    %51 = tpu.matmul %49, %50, %cst_24 {dimension_numbers = #tpu.dot_dimension_numbers<[1], [0], [0], [1], [0, 0, 1, 1], [], []>} : vector<16x128xbf16>, vector<128x384xbf16>, vector<16x384xf32> -> vector<16x384xf32>
    %c0_25 = arith.constant 0 : index
    %c0_26 = arith.constant 0 : index
    %52 = vector.load %arg6[%c0_25, %c0_26] : memref<1x384xf32, #tpu.memory_space<vmem>>, vector<1x384xf32>
    %53 = vector.broadcast %52 : vector<1x384xf32> to vector<16x384xf32>
    %54 = arith.addf %51, %53 : vector<16x384xf32>
    %55 = vector.extract_strided_slice %48 {offsets = [0, 0], sizes = [16, 128], strides = [1, 1]} : vector<16x384xf32> to vector<16x128xf32>
    %56 = vector.extract_strided_slice %54 {offsets = [0, 0], sizes = [16, 128], strides = [1, 1]} : vector<16x384xf32> to vector<16x128xf32>
    %57 = arith.addf %55, %56 : vector<16x128xf32>
    %58 = arith.negf %57 : vector<16x128xf32>
    %59 = math.exp %58 : vector<16x128xf32>
    %cst_27 = arith.constant 1.000000e+00 : f32
    %60 = vector.broadcast %cst_27 : f32 to vector<16x128xf32>
    %61 = arith.addf %60, %59 : vector<16x128xf32>
    %62 = arith.divf %60, %61 : vector<16x128xf32>
    %63 = vector.extract_strided_slice %48 {offsets = [0, 128], sizes = [16, 128], strides = [1, 1]} : vector<16x384xf32> to vector<16x128xf32>
    %64 = vector.extract_strided_slice %54 {offsets = [0, 128], sizes = [16, 128], strides = [1, 1]} : vector<16x384xf32> to vector<16x128xf32>
    %65 = arith.addf %63, %64 : vector<16x128xf32>
    %66 = arith.negf %65 : vector<16x128xf32>
    %67 = math.exp %66 : vector<16x128xf32>
    %cst_28 = arith.constant 1.000000e+00 : f32
    %68 = vector.broadcast %cst_28 : f32 to vector<16x128xf32>
    %69 = arith.addf %68, %67 : vector<16x128xf32>
    %70 = arith.divf %68, %69 : vector<16x128xf32>
    %71 = vector.extract_strided_slice %48 {offsets = [0, 256], sizes = [16, 128], strides = [1, 1]} : vector<16x384xf32> to vector<16x128xf32>
    %72 = vector.extract_strided_slice %54 {offsets = [0, 256], sizes = [16, 128], strides = [1, 1]} : vector<16x384xf32> to vector<16x128xf32>
    %73 = arith.mulf %62, %72 : vector<16x128xf32>
    %74 = arith.addf %71, %73 : vector<16x128xf32>
    %75 = math.tanh %74 : vector<16x128xf32>
    %cst_29 = arith.constant 1.000000e+00 : f32
    %76 = vector.broadcast %cst_29 : f32 to vector<16x128xf32>
    %77 = arith.subf %76, %70 : vector<16x128xf32>
    %78 = arith.mulf %77, %75 : vector<16x128xf32>
    %79 = arith.mulf %70, %40 : vector<16x128xf32>
    %80 = arith.addf %78, %79 : vector<16x128xf32>
    %c0_30 = arith.constant 0 : index
    %c0_31 = arith.constant 0 : index
    %81 = vector.load %arg7[%c0_30, %c0_31] : memref<128x256xf32, #tpu.memory_space<vmem>>, vector<128x256xf32>
    %cst_32 = arith.constant dense<0.000000e+00> : vector<16x256xf32>
    %82 = tpu.matmul %80, %81, %cst_32 {dimension_numbers = #tpu.dot_dimension_numbers<[1], [0], [0], [1], [0, 0, 1, 1], [], []>} : vector<16x128xf32>, vector<128x256xf32>, vector<16x256xf32> -> vector<16x256xf32>
    %c0_33 = arith.constant 0 : index
    %c0_34 = arith.constant 0 : index
    %83 = vector.load %arg8[%c0_33, %c0_34] : memref<1x256xf32, #tpu.memory_space<vmem>>, vector<1x256xf32>
    %84 = vector.broadcast %83 : vector<1x256xf32> to vector<16x256xf32>
    %85 = arith.addf %82, %84 : vector<16x256xf32>
    %cst_35 = arith.constant dense<0xFF800000> : vector<16xf32>
    %86 = vector.multi_reduction <maximumf>, %85, %cst_35 [1] : vector<16x256xf32> to vector<16xf32>
    %87 = vector.shape_cast %86 : vector<16xf32> to vector<16x1xf32>
    %88 = vector.broadcast %87 : vector<16x1xf32> to vector<16x256xf32>
    %89 = arith.subf %85, %88 : vector<16x256xf32>
    %90 = math.exp %89 : vector<16x256xf32>
    %cst_36 = arith.constant dense<0.000000e+00> : vector<16xf32>
    %91 = vector.multi_reduction <add>, %90, %cst_36 [1] : vector<16x256xf32> to vector<16xf32>
    %92 = vector.shape_cast %91 : vector<16xf32> to vector<16x1xf32>
    %93 = math.log %92 : vector<16x1xf32>
    %94 = vector.broadcast %93 : vector<16x1xf32> to vector<16x256xf32>
    %95 = arith.subf %89, %94 : vector<16x256xf32>
    %c0_37 = arith.constant 0 : index
    %c0_38 = arith.constant 0 : index
    %96 = vector.load %arg9[%c0_37, %c0_38] : memref<16x256xf32, #tpu.memory_space<vmem>>, vector<16x256xf32>
    tpu.vector_store %arg9[%c0_37, %c0_38], %95 {strides = array<i32>} : memref<16x256xf32, #tpu.memory_space<vmem>>, vector<16x256xf32>,
    %c0_39 = arith.constant 0 : index
    %c0_40 = arith.constant 0 : index
    %97 = vector.load %arg10[%c0_39, %c0_40] : memref<16x128xf32, #tpu.memory_space<vmem>>, vector<16x128xf32>
    tpu.vector_store %arg10[%c0_39, %c0_40], %80 {strides = array<i32>} : memref<16x128xf32, #tpu.memory_space<vmem>>, vector<16x128xf32>,
    return
  }
  func.func @transform_0(%arg0: i32) -> (i32, i32) {
    %c0_i32 = arith.constant 0 : i32
    %c0_i32_0 = arith.constant 0 : i32
    return %arg0, %c0_i32 : i32, i32
  }
  func.func @transform_1(%arg0: i32) -> (i32, i32) {
    %c0_i32 = arith.constant 0 : i32
    %c0_i32_0 = arith.constant 0 : i32
    return %arg0, %c0_i32 : i32, i32
  }
  func.func @transform_2(%arg0: i32) -> (i32, i32) {
    %c0_i32 = arith.constant 0 : i32
    %c0_i32_0 = arith.constant 0 : i32
    %c0_i32_1 = arith.constant 0 : i32
    return %c0_i32, %c0_i32_0 : i32, i32
  }
  func.func @transform_3(%arg0: i32) -> (i32, i32) {
    %c0_i32 = arith.constant 0 : i32
    %c0_i32_0 = arith.constant 0 : i32
    %c0_i32_1 = arith.constant 0 : i32
    return %c0_i32, %c0_i32_0 : i32, i32
  }
  func.func @transform_4(%arg0: i32) -> (i32, i32) {
    %c0_i32 = arith.constant 0 : i32
    %c0_i32_0 = arith.constant 0 : i32
    %c0_i32_1 = arith.constant 0 : i32
    return %c0_i32, %c0_i32_0 : i32, i32
  }
  func.func @transform_5(%arg0: i32) -> (i32, i32) {
    %c0_i32 = arith.constant 0 : i32
    %c0_i32_0 = arith.constant 0 : i32
    %c0_i32_1 = arith.constant 0 : i32
    return %c0_i32, %c0_i32_0 : i32, i32
  }
  func.func @transform_6(%arg0: i32) -> (i32, i32) {
    %c0_i32 = arith.constant 0 : i32
    %c0_i32_0 = arith.constant 0 : i32
    %c0_i32_1 = arith.constant 0 : i32
    return %c0_i32, %c0_i32_0 : i32, i32
  }
  func.func @transform_7(%arg0: i32) -> (i32, i32) {
    %c0_i32 = arith.constant 0 : i32
    %c0_i32_0 = arith.constant 0 : i32
    %c0_i32_1 = arith.constant 0 : i32
    return %c0_i32, %c0_i32_0 : i32, i32
  }
  func.func @transform_8(%arg0: i32) -> (i32, i32) {
    %c0_i32 = arith.constant 0 : i32
    %c0_i32_0 = arith.constant 0 : i32
    return %arg0, %c0_i32 : i32, i32
  }
  func.func @transform_9(%arg0: i32) -> (i32, i32) {
    %c0_i32 = arith.constant 0 : i32
    %c0_i32_0 = arith.constant 0 : i32
    return %arg0, %c0_i32 : i32, i32
  }
}

</mosaic_0001>

<llo_original>
// kernel: tpu_custom_call.1
$region0: #{tpu_custom_call.1}
  #allocation0 [shape = 'u32[]', space=smem, size = 0x4, offset = 0x4, fixed_abs, tag = 'smem constant byte address 0x4 - core index']
  #allocation1 [shape = 'u32[72,128]{1,0:T(1,128)}', space=vmem, size = 0x9000, scoped, tag = 'internal scratch']
  %s0 = inlined_call_operand.hbm [shape: bf16[16,128], index: 0, kind: input, shape index: {}]
  %s1 = inlined_call_operand.hbm [shape: f32[16,128], index: 1, kind: input, shape index: {}]
  %s2 = inlined_call_operand.hbm [shape: bf16[128,384], index: 2, kind: input, shape index: {}]
  %s3 = inlined_call_operand.hbm [shape: bf16[128,384], index: 3, kind: input, shape index: {}]
  %s4 = inlined_call_operand.vmem [shape: f32[1,384], index: 4, kind: input, shape index: {}]
  %s5 = inlined_call_operand.hbm [shape: f32[1,384], index: 5, kind: input, shape index: {}]
  %s6 = inlined_call_operand.hbm [shape: f32[128,256], index: 6, kind: input, shape index: {}]
  %s7 = inlined_call_operand.vmem [shape: f32[1,256], index: 7, kind: input, shape index: {}]
  %s8 = inlined_call_operand.hbm [shape: f32[16,256], index: 8, kind: output, shape index: {0}]
  %s9 = inlined_call_operand.hbm [shape: f32[16,128], index: 9, kind: output, shape index: {1}]
  %10 = xla_tuple %s8, %s9
  %s11 = sld [smem:[#allocation0]]
  $region74: #{tpu_custom_call.1} parent=0
    _
  %s13 = ssub.s32 1, %s11
  %s14 = scalar_select 0, %s13, %s11
  $region1: #{tpu_custom_call.1} parent=0
    #allocation2 [shape = 'u8[4096]{0}', space=vmem, size = 0x1000, scoped, tag = 'input window, operand 0, single buffered']
    #allocation3 [shape = 's32[1]{0}', space=sflag, size = 0x4, scoped, tag = 'scoped memory for tpu_custom_call.1']
    #allocation4 [shape = 's32[1]{0}', space=sflag, size = 0x4, scoped, tag = 'scoped memory for tpu_custom_call.1']
    #allocation5 [shape = 'u8[8192]{0}', space=vmem, size = 0x2000, scoped, tag = 'input window, operand 1, single buffered']
    #allocation6 [shape = 's32[1]{0}', space=sflag, size = 0x4, scoped, tag = 'scoped memory for tpu_custom_call.1']
    #allocation7 [shape = 'u8[98304]{0}', space=vmem, size = 0x18000, scoped, tag = 'input window, operand 2, single buffered']
    #allocation8 [shape = 'u8[98304]{0}', space=vmem, size = 0x18000, scoped, tag = 'input window, operand 3, single buffered']
    #allocation9 [shape = 's32[1]{0}', space=sflag, size = 0x4, scoped, tag = 'scoped memory for tpu_custom_call.1']
    #allocation10 [shape = 'u8[1536]{0}', space=vmem, size = 0x800, scoped, tag = 'input window, operand 5, single buffered']
    #allocation11 [shape = 'u8[131072]{0}', space=vmem, size = 0x20000, scoped, tag = 'input window, operand 6, single buffered']
    #allocation12 [shape = 's32[1]{0}', space=sflag, size = 0x4, scoped, tag = 'scoped memory for tpu_custom_call.1']
    #allocation13 [shape = 'u8[16384]{0}', space=vmem, size = 0x4000, scoped, tag = 'output window, operand 0, single buffered']
    #allocation14 [shape = 'u8[8192]{0}', space=vmem, size = 0x2000, scoped, tag = 'output window, operand 1, single buffered']
    #allocation15 [shape = 's32[1]{0}', space=sflag, size = 0x4, scoped, tag = 'scoped memory for tpu_custom_call.1']
    %15 = vsyncpa [#allocation3], 0
    %16 = vsyncpa [#allocation6], 0
    %17 = vsyncpa [#allocation9], 0
    %18 = vsyncpa [#allocation12], 0
    %19 = vsyncpa [#allocation4], 0
    %20 = vsyncpa [#allocation15], 0
    // Predicated region
    $region2: #{tpu_custom_call.1} parent=1 // pred_check
      _
    $region3: #{tpu_custom_call.1} parent=1 // pred_check_branch
      %22 = sbr.rel (0) target = $region5
    $region4: #{tpu_custom_call.1} parent=1 // pred_region
      %24 = vsyncadd [#allocation3], 0
      %s25 = sshll.u32 %s0, 4
      %s26 = int_to_ptr.hbm [resolvable:$true] %s25
      %s27 = sshll.u32 [#allocation2], 4
      %s28 = int_to_ptr.vmem [resolvable:$true] %s27
      %33 = dma.hbm_to_vmem [thread:$0]  %s26, 128, %s28, [#allocation3], 64, 64, 4
    $region5: #{tpu_custom_call.1} parent=1 // pred_fallthru
      _
    // Predicated region
    $region6: #{tpu_custom_call.1} parent=1 // pred_check
      _
    $region7: #{tpu_custom_call.1} parent=1 // pred_check_branch
      %35 = sbr.rel (0) target = $region9
    $region8: #{tpu_custom_call.1} parent=1 // pred_region
      %37 = vsyncadd [#allocation6], 0
      %s38 = sshll.u32 %s1, 4
      %s39 = int_to_ptr.hbm [resolvable:$true] %s38
      %s40 = sshll.u32 [#allocation5], 4
      %s41 = int_to_ptr.vmem [resolvable:$true] %s40
      %46 = dma.hbm_to_vmem [thread:$0]  %s39, 256, %s41, [#allocation6], 128, 128, 8
    $region9: #{tpu_custom_call.1} parent=1 // pred_fallthru
      _
    // Predicated region
    $region10: #{tpu_custom_call.1} parent=1 // pred_check
      _
    $region11: #{tpu_custom_call.1} parent=1 // pred_check_branch
      %48 = sbr.rel (0) target = $region13
    $region12: #{tpu_custom_call.1} parent=1 // pred_region
      %50 = vsyncadd [#allocation6], 0
      %s51 = sshll.u32 %s2, 4
      %s52 = int_to_ptr.hbm [resolvable:$true] %s51
      %s53 = sshll.u32 [#allocation7], 4
      %s54 = int_to_ptr.vmem [resolvable:$true] %s53
      %59 = dma.hbm_to_vmem [thread:$0]  %s52, 3072, %s54, [#allocation6], 192, 192, 12
    $region13: #{tpu_custom_call.1} parent=1 // pred_fallthru
      _
    // Predicated region
    $region14: #{tpu_custom_call.1} parent=1 // pred_check
      _
    $region15: #{tpu_custom_call.1} parent=1 // pred_check_branch
      %61 = sbr.rel (0) target = $region17
    $region16: #{tpu_custom_call.1} parent=1 // pred_region
      %63 = vsyncadd [#allocation9], 0
      %s64 = sshll.u32 %s3, 4
      %s65 = int_to_ptr.hbm [resolvable:$true] %s64
      %s66 = sshll.u32 [#allocation8], 4
      %s67 = int_to_ptr.vmem [resolvable:$true] %s66
      %72 = dma.hbm_to_vmem [thread:$0]  %s65, 3072, %s67, [#allocation9], 192, 192, 12
    $region17: #{tpu_custom_call.1} parent=1 // pred_fallthru
      _
    // Predicated region
    $region18: #{tpu_custom_call.1} parent=1 // pred_check
      _
    $region19: #{tpu_custom_call.1} parent=1 // pred_check_branch
      %74 = sbr.rel (0) target = $region21
    $region20: #{tpu_custom_call.1} parent=1 // pred_region
      _
    $region21: #{tpu_custom_call.1} parent=1 // pred_fallthru
      _
    // Predicated region
    $region22: #{tpu_custom_call.1} parent=1 // pred_check
      _
    $region23: #{tpu_custom_call.1} parent=1 // pred_check_branch
      %76 = sbr.rel (0) target = $region25
    $region24: #{tpu_custom_call.1} parent=1 // pred_region
      %78 = vsyncadd [#allocation9], 0
      %s80 = sshll.u32 %s5, 4
      %s81 = int_to_ptr.hbm [resolvable:$true] %s80
      %s82 = sshll.u32 [#allocation10], 4
      %s83 = int_to_ptr.vmem [resolvable:$true] %s82
      %85 = dma.hbm_to_vmem [thread:$0]  %s81, 48, %s83, [#allocation9]
    $region25: #{tpu_custom_call.1} parent=1 // pred_fallthru
      _
    // Predicated region
    $region26: #{tpu_custom_call.1} parent=1 // pred_check
      _
    $region27: #{tpu_custom_call.1} parent=1 // pred_check_branch
      %87 = sbr.rel (0) target = $region29
    $region28: #{tpu_custom_call.1} parent=1 // pred_region
      %89 = vsyncadd [#allocation12], 0
      %s90 = sshll.u32 %s6, 4
      %s91 = int_to_ptr.hbm [resolvable:$true] %s90
      %s92 = sshll.u32 [#allocation11], 4
      %s93 = int_to_ptr.vmem [resolvable:$true] %s92
      %98 = dma.hbm_to_vmem [thread:$0]  %s91, 4096, %s93, [#allocation12], 256, 256, 16
    $region29: #{tpu_custom_call.1} parent=1 // pred_fallthru
      _
    // Predicated region
    $region30: #{tpu_custom_call.1} parent=1 // pred_check
      _
    $region31: #{tpu_custom_call.1} parent=1 // pred_check_branch
      %100 = sbr.rel (0) target = $region33
    $region32: #{tpu_custom_call.1} parent=1 // pred_region
      _
    $region33: #{tpu_custom_call.1} parent=1 // pred_fallthru
      _
    // Predicated region
    $region34: #{tpu_custom_call.1} parent=1 // pred_check
      _
    $region35: #{tpu_custom_call.1} parent=1 // pred_check_branch
      %102 = sbr.rel (0) target = $region37
    $region36: #{tpu_custom_call.1} parent=1 // pred_region
      %104 = dma.done [#allocation3], 128
    $region37: #{tpu_custom_call.1} parent=1 // pred_fallthru
      _
    // Predicated region
    $region38: #{tpu_custom_call.1} parent=1 // pred_check
      _
    $region39: #{tpu_custom_call.1} parent=1 // pred_check_branch
      %106 = sbr.rel (0) target = $region41
    $region40: #{tpu_custom_call.1} parent=1 // pred_region
      %108 = dma.done [#allocation6], 256
    $region41: #{tpu_custom_call.1} parent=1 // pred_fallthru
      _
    // Predicated region
    $region42: #{tpu_custom_call.1} parent=1 // pred_check
      _
    $region43: #{tpu_custom_call.1} parent=1 // pred_check_branch
      %110 = sbr.rel (0) target = $region45
    $region44: #{tpu_custom_call.1} parent=1 // pred_region
      %112 = dma.done [#allocation6], 3072
    $region45: #{tpu_custom_call.1} parent=1 // pred_fallthru
      _
    // Predicated region
    $region46: #{tpu_custom_call.1} parent=1 // pred_check
      _
    $region47: #{tpu_custom_call.1} parent=1 // pred_check_branch
      %114 = sbr.rel (0) target = $region49
    $region48: #{tpu_custom_call.1} parent=1 // pred_region
      %116 = dma.done [#allocation9], 3072
    $region49: #{tpu_custom_call.1} parent=1 // pred_fallthru
      _
    // Predicated region
    $region50: #{tpu_custom_call.1} parent=1 // pred_check
      _
    $region51: #{tpu_custom_call.1} parent=1 // pred_check_branch
      %118 = sbr.rel (0) target = $region53
    $region52: #{tpu_custom_call.1} parent=1 // pred_region
      %120 = dma.done [#allocation9], 48
    $region53: #{tpu_custom_call.1} parent=1 // pred_fallthru
      _
    // Predicated region
    $region54: #{tpu_custom_call.1} parent=1 // pred_check
      _
    $region55: #{tpu_custom_call.1} parent=1 // pred_check_branch
      %122 = sbr.rel (0) target = $region57
    $region56: #{tpu_custom_call.1} parent=1 // pred_region
      %124 = dma.done [#allocation12], 4096
    $region57: #{tpu_custom_call.1} parent=1 // pred_fallthru
      _
    %v125 = vld [vmem:[#allocation2] sm:$0xf]
    %v126 = vld [vmem:[#allocation2 + $0x4] sm:$0xf]
    %v127 = vld [vmem:[#allocation5] sm:$0xff]
    %v128 = vld [vmem:[#allocation5 + $0x8] sm:$0xff]
    %v129 = vunpack.c.l.bf16 %v125
    %v130 = vunpack.c.l.bf16 %v126
    %v131 = vmax.f32 %v129, 0.0
    %v132 = vmax.f32 %v130, 0.0
    %v133 = vpack.c.bf16 %v132, %v131
    %v134 = vld [vmem:[#allocation7] sm:$0xff]
    %v135 = vld [vmem:[#allocation7 + $0x8] sm:$0xf]
    %v136 = vld [vmem:[#allocation7 + $0xc] sm:$0xff]
    %v137 = vld [vmem:[#allocation7 + $0x14] sm:$0xf]
    %v138 = vld [vmem:[#allocation7 + $0x18] sm:$0xff]
    %v139 = vld [vmem:[#allocation7 + $0x20] sm:$0xf]
    %v140 = vld [vmem:[#allocation7 + $0x24] sm:$0xff]
    %v141 = vld [vmem:[#allocation7 + $0x2c] sm:$0xf]
    %v142 = vld [vmem:[#allocation7 + $0x30] sm:$0xff]
    %v143 = vld [vmem:[#allocation7 + $0x38] sm:$0xf]
    %v144 = vld [vmem:[#allocation7 + $0x3c] sm:$0xff]
    %v145 = vld [vmem:[#allocation7 + $0x44] sm:$0xf]
    %v146 = vld [vmem:[#allocation7 + $0x48] sm:$0xff]
    %v147 = vld [vmem:[#allocation7 + $0x50] sm:$0xf]
    %v148 = vld [vmem:[#allocation7 + $0x54] sm:$0xff]
    %v149 = vld [vmem:[#allocation7 + $0x5c] sm:$0xf]
    %v150 = vld [vmem:[#allocation7 + $0x60] sm:$0xff]
    %v151 = vld [vmem:[#allocation7 + $0x68] sm:$0xf]
    %v152 = vld [vmem:[#allocation7 + $0x6c] sm:$0xff]
    %v153 = vld [vmem:[#allocation7 + $0x74] sm:$0xf]
    %v154 = vld [vmem:[#allocation7 + $0x78] sm:$0xff]
    %v155 = vld [vmem:[#allocation7 + $0x80] sm:$0xf]
    %v156 = vld [vmem:[#allocation7 + $0x84] sm:$0xff]
    %v157 = vld [vmem:[#allocation7 + $0x8c] sm:$0xf]
    %v158 = vld [vmem:[#allocation7 + $0x90] sm:$0xff]
    %v159 = vld [vmem:[#allocation7 + $0x98] sm:$0xf]
    %v160 = vld [vmem:[#allocation7 + $0x9c] sm:$0xff]
    %v161 = vld [vmem:[#allocation7 + $0xa4] sm:$0xf]
    %v162 = vld [vmem:[#allocation7 + $0xa8] sm:$0xff]
    %v163 = vld [vmem:[#allocation7 + $0xb0] sm:$0xf]
    %v164 = vld [vmem:[#allocation7 + $0xb4] sm:$0xff]
    %v165 = vld [vmem:[#allocation7 + $0xbc] sm:$0xf]
    %v166 = vld [vmem:[%s4] sm:$0x7]
    %v168 = vperm.slane %v166, 0
    %v169 = vperm.slane %v166, 1
    %v170 = vperm.slane %v166, 2
    %v206 = vunpack.c.l.b16 %v134
    %v207 = vunpack.c.h.b16 %v134
    %v208 = vunpack.c.l.b16 %v135
    %v209 = vunpack.c.l.b16 %v136
    %v210 = vunpack.c.h.b16 %v136
    %v211 = vunpack.c.l.b16 %v137
    %v212 = vunpack.c.l.b16 %v138
    %v213 = vunpack.c.h.b16 %v138
    %v214 = vunpack.c.l.b16 %v139
    %v215 = vunpack.c.l.b16 %v140
    %v216 = vunpack.c.h.b16 %v140
    %v217 = vunpack.c.l.b16 %v141
    %v218 = vunpack.c.l.b16 %v142
    %v219 = vunpack.c.h.b16 %v142
    %v220 = vunpack.c.l.b16 %v143
    %v221 = vunpack.c.l.b16 %v144
    %v222 = vunpack.c.h.b16 %v144
    %v223 = vunpack.c.l.b16 %v145
    %v224 = vunpack.c.l.b16 %v146
    %v225 = vunpack.c.h.b16 %v146
    %v226 = vunpack.c.l.b16 %v147
    %v227 = vunpack.c.l.b16 %v148
    %v228 = vunpack.c.h.b16 %v148
    %v229 = vunpack.c.l.b16 %v149
    %v230 = vunpack.c.l.b16 %v150
    %v231 = vunpack.c.h.b16 %v150
    %v232 = vunpack.c.l.b16 %v151
    %v233 = vunpack.c.l.b16 %v152
    %v234 = vunpack.c.h.b16 %v152
    %v235 = vunpack.c.l.b16 %v153
    %v236 = vunpack.c.l.b16 %v154
    %v237 = vunpack.c.h.b16 %v154
    %v238 = vunpack.c.l.b16 %v155
    %v239 = vunpack.c.l.b16 %v156
    %v240 = vunpack.c.h.b16 %v156
    %v241 = vunpack.c.l.b16 %v157
    %v242 = vunpack.c.l.b16 %v158
    %v243 = vunpack.c.h.b16 %v158
    %v244 = vunpack.c.l.b16 %v159
    %v245 = vunpack.c.l.b16 %v160
    %v246 = vunpack.c.h.b16 %v160
    %v247 = vunpack.c.l.b16 %v161
    %v248 = vunpack.c.l.b16 %v162
    %v249 = vunpack.c.h.b16 %v162
    %v250 = vunpack.c.l.b16 %v163
    %v251 = vunpack.c.l.b16 %v164
    %v252 = vunpack.c.h.b16 %v164
    %v253 = vunpack.c.l.b16 %v165
    %v254 = vpack.c.b16 %v209, %v206
    %v255 = vpack.c.b16 %v210, %v207
    %v256 = vpack.c.b16 %v211, %v208
    %v257 = vpack.c.b16 %v215, %v212
    %v258 = vpack.c.b16 %v216, %v213
    %v259 = vpack.c.b16 %v217, %v214
    %v260 = vpack.c.b16 %v221, %v218
    %v261 = vpack.c.b16 %v222, %v219
    %v262 = vpack.c.b16 %v223, %v220
    %v263 = vpack.c.b16 %v227, %v224
    %v264 = vpack.c.b16 %v228, %v225
    %v265 = vpack.c.b16 %v229, %v226
    %v266 = vpack.c.b16 %v233, %v230
    %v267 = vpack.c.b16 %v234, %v231
    %v268 = vpack.c.b16 %v235, %v232
    %v269 = vpack.c.b16 %v239, %v236
    %v270 = vpack.c.b16 %v240, %v237
    %v271 = vpack.c.b16 %v241, %v238
    %v272 = vpack.c.b16 %v245, %v242
    %v273 = vpack.c.b16 %v246, %v243
    %v274 = vpack.c.b16 %v247, %v244
    %v275 = vpack.c.b16 %v251, %v248
    %v276 = vpack.c.b16 %v252, %v249
    %v277 = vpack.c.b16 %v253, %v250
    %302 = vmatpush.bf16.msra.mxu0 %v275
    %303 = vmatpush.bf16.msra.mxu0 %v272
    %304 = vmatpush.bf16.msra.mxu0 %v269
    %305 = vmatpush.bf16.msra.mxu0 %v266
    %306 = vmatpush.bf16.msra.mxu0 %v263
    %307 = vmatpush.bf16.msra.mxu0 %v260
    %308 = vmatpush.bf16.msra.mxu0 %v257
    %309 = vmatpush.bf16.msra.mxu0 %v254
    %310 = vmatmul.bf16.gmra.mxu0 %v133
    %v311 = vpop.f32.mrf.mxu0
    %v312 = vadd.f32 %v168, %v311
    %v313 = vpop.f32.mrf.mxu0
    %v314 = vadd.f32 %v168, %v313
    %315 = vdwg.mxu0
    %316 = vmatpush.bf16.msra.mxu0 %v276
    %317 = vmatpush.bf16.msra.mxu0 %v273
    %318 = vmatpush.bf16.msra.mxu0 %v270
    %319 = vmatpush.bf16.msra.mxu0 %v267
    %320 = vmatpush.bf16.msra.mxu0 %v264
    %321 = vmatpush.bf16.msra.mxu0 %v261
    %322 = vmatpush.bf16.msra.mxu0 %v258
    %323 = vmatpush.bf16.msra.mxu0 %v255
    %324 = vmatmul.bf16.gmra.mxu0 %v133
    %v325 = vpop.f32.mrf.mxu0
    %v326 = vadd.f32 %v169, %v325
    %v327 = vpop.f32.mrf.mxu0
    %v328 = vadd.f32 %v169, %v327
    %329 = vdwg.mxu0
    %330 = vmatpush.bf16.msra.mxu0 %v277
    %331 = vmatpush.bf16.msra.mxu0 %v274
    %332 = vmatpush.bf16.msra.mxu0 %v271
    %333 = vmatpush.bf16.msra.mxu0 %v268
    %334 = vmatpush.bf16.msra.mxu0 %v265
    %335 = vmatpush.bf16.msra.mxu0 %v262
    %336 = vmatpush.bf16.msra.mxu0 %v259
    %337 = vmatpush.bf16.msra.mxu0 %v256
    %338 = vmatmul.bf16.gmra.mxu0 %v133
    %v339 = vpop.f32.mrf.mxu0
    %v340 = vadd.f32 %v170, %v339
    %v341 = vpop.f32.mrf.mxu0
    %v342 = vadd.f32 %v170, %v341
    %343 = vdwg.mxu0
    %v344 = vpack.c.bf16 %v128, %v127
    %v345 = vld [vmem:[#allocation8] sm:$0xff]
    %v346 = vld [vmem:[#allocation8 + $0x8] sm:$0xf]
    %v347 = vld [vmem:[#allocation8 + $0xc] sm:$0xff]
    %v348 = vld [vmem:[#allocation8 + $0x14] sm:$0xf]
    %v349 = vld [vmem:[#allocation8 + $0x18] sm:$0xff]
    %v350 = vld [vmem:[#allocation8 + $0x20] sm:$0xf]
    %v351 = vld [vmem:[#allocation8 + $0x24] sm:$0xff]
    %v352 = vld [vmem:[#allocation8 + $0x2c] sm:$0xf]
    %v353 = vld [vmem:[#allocation8 + $0x30] sm:$0xff]
    %v354 = vld [vmem:[#allocation8 + $0x38] sm:$0xf]
    %v355 = vld [vmem:[#allocation8 + $0x3c] sm:$0xff]
    %v356 = vld [vmem:[#allocation8 + $0x44] sm:$0xf]
    %v357 = vld [vmem:[#allocation8 + $0x48] sm:$0xff]
    %v358 = vld [vmem:[#allocation8 + $0x50] sm:$0xf]
    %v359 = vld [vmem:[#allocation8 + $0x54] sm:$0xff]
    %v360 = vld [vmem:[#allocation8 + $0x5c] sm:$0xf]
    %v361 = vld [vmem:[#allocation8 + $0x60] sm:$0xff]
    %v362 = vld [vmem:[#allocation8 + $0x68] sm:$0xf]
    %v363 = vld [vmem:[#allocation8 + $0x6c] sm:$0xff]
    %v364 = vld [vmem:[#allocation8 + $0x74] sm:$0xf]
    %v365 = vld [vmem:[#allocation8 + $0x78] sm:$0xff]
    %v366 = vld [vmem:[#allocation8 + $0x80] sm:$0xf]
    %v367 = vld [vmem:[#allocation8 + $0x84] sm:$0xff]
    %v368 = vld [vmem:[#allocation8 + $0x8c] sm:$0xf]
    %v369 = vld [vmem:[#allocation8 + $0x90] sm:$0xff]
    %v370 = vld [vmem:[#allocation8 + $0x98] sm:$0xf]
    %v371 = vld [vmem:[#allocation8 + $0x9c] sm:$0xff]
    %v372 = vld [vmem:[#allocation8 + $0xa4] sm:$0xf]
    %v373 = vld [vmem:[#allocation8 + $0xa8] sm:$0xff]
    %v374 = vld [vmem:[#allocation8 + $0xb0] sm:$0xf]
    %v375 = vld [vmem:[#allocation8 + $0xb4] sm:$0xff]
    %v376 = vld [vmem:[#allocation8 + $0xbc] sm:$0xf]
    %v377 = vld [vmem:[#allocation10] sm:$0x7]
    %v379 = vperm.slane %v377, 0
    %v380 = vperm.slane %v377, 1
    %v381 = vperm.slane %v377, 2
    %v417 = vunpack.c.l.b16 %v345
    %v418 = vunpack.c.h.b16 %v345
    %v419 = vunpack.c.l.b16 %v346
    %v420 = vunpack.c.l.b16 %v347
    %v421 = vunpack.c.h.b16 %v347
    %v422 = vunpack.c.l.b16 %v348
    %v423 = vunpack.c.l.b16 %v349
    %v424 = vunpack.c.h.b16 %v349
    %v425 = vunpack.c.l.b16 %v350
    %v426 = vunpack.c.l.b16 %v351
    %v427 = vunpack.c.h.b16 %v351
    %v428 = vunpack.c.l.b16 %v352
    %v429 = vunpack.c.l.b16 %v353
    %v430 = vunpack.c.h.b16 %v353
    %v431 = vunpack.c.l.b16 %v354
    %v432 = vunpack.c.l.b16 %v355
    %v433 = vunpack.c.h.b16 %v355
    %v434 = vunpack.c.l.b16 %v356
    %v435 = vunpack.c.l.b16 %v357
    %v436 = vunpack.c.h.b16 %v357
    %v437 = vunpack.c.l.b16 %v358
    %v438 = vunpack.c.l.b16 %v359
    %v439 = vunpack.c.h.b16 %v359
    %v440 = vunpack.c.l.b16 %v360
    %v441 = vunpack.c.l.b16 %v361
    %v442 = vunpack.c.h.b16 %v361
    %v443 = vunpack.c.l.b16 %v362
    %v444 = vunpack.c.l.b16 %v363
    %v445 = vunpack.c.h.b16 %v363
    %v446 = vunpack.c.l.b16 %v364
    %v447 = vunpack.c.l.b16 %v365
    %v448 = vunpack.c.h.b16 %v365
    %v449 = vunpack.c.l.b16 %v366
    %v450 = vunpack.c.l.b16 %v367
    %v451 = vunpack.c.h.b16 %v367
    %v452 = vunpack.c.l.b16 %v368
    %v453 = vunpack.c.l.b16 %v369
    %v454 = vunpack.c.h.b16 %v369
    %v455 = vunpack.c.l.b16 %v370
    %v456 = vunpack.c.l.b16 %v371
    %v457 = vunpack.c.h.b16 %v371
    %v458 = vunpack.c.l.b16 %v372
    %v459 = vunpack.c.l.b16 %v373
    %v460 = vunpack.c.h.b16 %v373
    %v461 = vunpack.c.l.b16 %v374
    %v462 = vunpack.c.l.b16 %v375
    %v463 = vunpack.c.h.b16 %v375
    %v464 = vunpack.c.l.b16 %v376
    %v465 = vpack.c.b16 %v420, %v417
    %v466 = vpack.c.b16 %v421, %v418
    %v467 = vpack.c.b16 %v422, %v419
    %v468 = vpack.c.b16 %v426, %v423
    %v469 = vpack.c.b16 %v427, %v424
    %v470 = vpack.c.b16 %v428, %v425
    %v471 = vpack.c.b16 %v432, %v429
    %v472 = vpack.c.b16 %v433, %v430
    %v473 = vpack.c.b16 %v434, %v431
    %v474 = vpack.c.b16 %v438, %v435
    %v475 = vpack.c.b16 %v439, %v436
    %v476 = vpack.c.b16 %v440, %v437
    %v477 = vpack.c.b16 %v444, %v441
    %v478 = vpack.c.b16 %v445, %v442
    %v479 = vpack.c.b16 %v446, %v443
    %v480 = vpack.c.b16 %v450, %v447
    %v481 = vpack.c.b16 %v451, %v448
    %v482 = vpack.c.b16 %v452, %v449
    %v483 = vpack.c.b16 %v456, %v453
    %v484 = vpack.c.b16 %v457, %v454
    %v485 = vpack.c.b16 %v458, %v455
    %v486 = vpack.c.b16 %v462, %v459
    %v487 = vpack.c.b16 %v463, %v460
    %v488 = vpack.c.b16 %v464, %v461
    %513 = vmatpush.bf16.msra.mxu0 %v486
    %514 = vmatpush.bf16.msra.mxu0 %v483
    %515 = vmatpush.bf16.msra.mxu0 %v480
    %516 = vmatpush.bf16.msra.mxu0 %v477
    %517 = vmatpush.bf16.msra.mxu0 %v474
    %518 = vmatpush.bf16.msra.mxu0 %v471
    %519 = vmatpush.bf16.msra.mxu0 %v468
    %520 = vmatpush.bf16.msra.mxu0 %v465
    %521 = vmatmul.bf16.gmra.mxu0 %v344
    %v522 = vpop.f32.mrf.mxu0
    %v523 = vadd.f32 %v379, %v522
    %v524 = vpop.f32.mrf.mxu0
    %v525 = vadd.f32 %v379, %v524
    %526 = vdwg.mxu0
    %527 = vmatpush.bf16.msra.mxu0 %v487
    %528 = vmatpush.bf16.msra.mxu0 %v484
    %529 = vmatpush.bf16.msra.mxu0 %v481
    %530 = vmatpush.bf16.msra.mxu0 %v478
    %531 = vmatpush.bf16.msra.mxu0 %v475
    %532 = vmatpush.bf16.msra.mxu0 %v472
    %533 = vmatpush.bf16.msra.mxu0 %v469
    %534 = vmatpush.bf16.msra.mxu0 %v466
    %535 = vmatmul.bf16.gmra.mxu0 %v344
    %v536 = vpop.f32.mrf.mxu0
    %v537 = vadd.f32 %v380, %v536
    %v538 = vpop.f32.mrf.mxu0
    %v539 = vadd.f32 %v380, %v538
    %540 = vdwg.mxu0
    %541 = vmatpush.bf16.msra.mxu0 %v488
    %542 = vmatpush.bf16.msra.mxu0 %v485
    %543 = vmatpush.bf16.msra.mxu0 %v482
    %544 = vmatpush.bf16.msra.mxu0 %v479
    %545 = vmatpush.bf16.msra.mxu0 %v476
    %546 = vmatpush.bf16.msra.mxu0 %v473
    %547 = vmatpush.bf16.msra.mxu0 %v470
    %548 = vmatpush.bf16.msra.mxu0 %v467
    %549 = vmatmul.bf16.gmra.mxu0 %v344
    %v550 = vpop.f32.mrf.mxu0
    %v551 = vadd.f32 %v381, %v550
    %v552 = vpop.f32.mrf.mxu0
    %v553 = vadd.f32 %v381, %v552
    %554 = vdwg.mxu0
    %v555 = vadd.f32 %v312, %v523
    %v556 = vadd.f32 %v314, %v525
    %v557 = vxor.u32 %v555, 2147483648
    %v558 = vxor.u32 %v556, 2147483648
    %v559 = vmul.f32 %v557, 1.442695
    %v560 = vpow.pop %v559
    %v561 = vmul.f32 %v558, 1.442695
    %v562 = vpow.pop %v561
    %v563 = vadd.f32 %v560, 1.0
    %v564 = vadd.f32 %v562, 1.0
    %v565 = vrcp.pop %v563
    %v566 = vmul.f32 %v563, %v565
    %v567 = vsub.f32 1.0, %v566
    %v568 = vmul.f32 %v565, %v567
    %v569 = vadd.f32 %v565, %v568
    %vm570 = vweird.f32 %v563
    %vm571 = vweird.f32 %v565
    %vm572 = vmor %vm570, %vm571
    %v573 = vsel %vm572, %v565, %v569
    %v574 = vand.u32 2147483647, %v563
    %vm575 = vcmp.eq.f32.partialorder %v574, 8.507059e+37
    %v576 = vand.u32 %v563, 2147483648
    %v577 = vor.u32 1.1754944e-38, %v576
    %v578 = vsel %vm575, %v577, %v573
    %v579 = vmul.f32 1.0, %v578
    %v580 = vrcp.pop %v564
    %v581 = vmul.f32 %v564, %v580
    %v582 = vsub.f32 1.0, %v581
    %v583 = vmul.f32 %v580, %v582
    %v584 = vadd.f32 %v580, %v583
    %vm585 = vweird.f32 %v564
    %vm586 = vweird.f32 %v580
    %vm587 = vmor %vm585, %vm586
    %v588 = vsel %vm587, %v580, %v584
    %v589 = vand.u32 2147483647, %v564
    %vm590 = vcmp.eq.f32.partialorder %v589, 8.507059e+37
    %v591 = vand.u32 %v564, 2147483648
    %v592 = vor.u32 1.1754944e-38, %v591
    %v593 = vsel %vm590, %v592, %v588
    %v594 = vmul.f32 1.0, %v593
    %v595 = vadd.f32 %v326, %v537
    %v596 = vadd.f32 %v328, %v539
    %v597 = vxor.u32 %v595, 2147483648
    %v598 = vxor.u32 %v596, 2147483648
    %v599 = vmul.f32 %v597, 1.442695
    %v600 = vpow.pop %v599
    %v601 = vmul.f32 %v598, 1.442695
    %v602 = vpow.pop %v601
    %v603 = vadd.f32 %v600, 1.0
    %v604 = vadd.f32 %v602, 1.0
    %v605 = vrcp.pop %v603
    %v606 = vmul.f32 %v603, %v605
    %v607 = vsub.f32 1.0, %v606
    %v608 = vmul.f32 %v605, %v607
    %v609 = vadd.f32 %v605, %v608
    %vm610 = vweird.f32 %v603
    %vm611 = vweird.f32 %v605
    %vm612 = vmor %vm610, %vm611
    %v613 = vsel %vm612, %v605, %v609
    %v614 = vand.u32 2147483647, %v603
    %vm615 = vcmp.eq.f32.partialorder %v614, 8.507059e+37
    %v616 = vand.u32 %v603, 2147483648
    %v617 = vor.u32 1.1754944e-38, %v616
    %v618 = vsel %vm615, %v617, %v613
    %v619 = vmul.f32 1.0, %v618
    %v620 = vrcp.pop %v604
    %v621 = vmul.f32 %v604, %v620
    %v622 = vsub.f32 1.0, %v621
    %v623 = vmul.f32 %v620, %v622
    %v624 = vadd.f32 %v620, %v623
    %vm625 = vweird.f32 %v604
    %vm626 = vweird.f32 %v620
    %vm627 = vmor %vm625, %vm626
    %v628 = vsel %vm627, %v620, %v624
    %v629 = vand.u32 2147483647, %v604
    %vm630 = vcmp.eq.f32.partialorder %v629, 8.507059e+37
    %v631 = vand.u32 %v604, 2147483648
    %v632 = vor.u32 1.1754944e-38, %v631
    %v633 = vsel %vm630, %v632, %v628
    %v634 = vmul.f32 1.0, %v633
    %v635 = vmul.f32 %v579, %v551
    %v636 = vmul.f32 %v594, %v553
    %v637 = vadd.f32 %v340, %v635
    %v638 = vadd.f32 %v342, %v636
    %v639 = vtanh.pop %v637
    %v640 = vtanh.pop %v638
    %v641 = vsub.f32 1.0, %v619
    %v642 = vsub.f32 1.0, %v634
    %v643 = vmul.f32 %v641, %v639
    %v644 = vmul.f32 %v642, %v640
    %v645 = vmul.f32 %v619, %v127
    %v646 = vmul.f32 %v634, %v128
    %v647 = vadd.f32 %v643, %v645
    %v648 = vadd.f32 %v644, %v646
    %v649 = vmax.f32 %v647, 0.0
    %v650 = vmax.f32 %v648, 0.0
    %v651 = vpack.c.bf16 %v650, %v649
    %652 = vmatpush.bf16.msra.mxu0 %v275
    %653 = vmatpush.bf16.msra.mxu0 %v272
    %654 = vmatpush.bf16.msra.mxu0 %v269
    %655 = vmatpush.bf16.msra.mxu0 %v266
    %656 = vmatpush.bf16.msra.mxu0 %v263
    %657 = vmatpush.bf16.msra.mxu0 %v260
    %658 = vmatpush.bf16.msra.mxu0 %v257
    %659 = vmatpush.bf16.msra.mxu0 %v254
    %660 = vmatmul.bf16.gmra.mxu0 %v651
    %v661 = vpop.f32.mrf.mxu0
    %v662 = vadd.f32 %v168, %v661
    %v663 = vpop.f32.mrf.mxu0
    %v664 = vadd.f32 %v168, %v663
    %665 = vdwg.mxu0
    %666 = vmatpush.bf16.msra.mxu0 %v276
    %667 = vmatpush.bf16.msra.mxu0 %v273
    %668 = vmatpush.bf16.msra.mxu0 %v270
    %669 = vmatpush.bf16.msra.mxu0 %v267
    %670 = vmatpush.bf16.msra.mxu0 %v264
    %671 = vmatpush.bf16.msra.mxu0 %v261
    %672 = vmatpush.bf16.msra.mxu0 %v258
    %673 = vmatpush.bf16.msra.mxu0 %v255
    %674 = vmatmul.bf16.gmra.mxu0 %v651
    %v675 = vpop.f32.mrf.mxu0
    %v676 = vadd.f32 %v169, %v675
    %v677 = vpop.f32.mrf.mxu0
    %v678 = vadd.f32 %v169, %v677
    %679 = vdwg.mxu0
    %680 = vmatpush.bf16.msra.mxu0 %v277
    %681 = vmatpush.bf16.msra.mxu0 %v274
    %682 = vmatpush.bf16.msra.mxu0 %v271
    %683 = vmatpush.bf16.msra.mxu0 %v268
    %684 = vmatpush.bf16.msra.mxu0 %v265
    %685 = vmatpush.bf16.msra.mxu0 %v262
    %686 = vmatpush.bf16.msra.mxu0 %v259
    %687 = vmatpush.bf16.msra.mxu0 %v256
    %688 = vmatmul.bf16.gmra.mxu0 %v651
    %v689 = vpop.f32.mrf.mxu0
    %v690 = vadd.f32 %v170, %v689
    %v691 = vpop.f32.mrf.mxu0
    %v692 = vadd.f32 %v170, %v691
    %693 = vdwg.mxu0
    %v694 = vpack.c.bf16 %v648, %v647
    %695 = vmatpush.bf16.msra.mxu0 %v486
    %696 = vmatpush.bf16.msra.mxu0 %v483
    %697 = vmatpush.bf16.msra.mxu0 %v480
    %698 = vmatpush.bf16.msra.mxu0 %v477
    %699 = vmatpush.bf16.msra.mxu0 %v474
    %700 = vmatpush.bf16.msra.mxu0 %v471
    %701 = vmatpush.bf16.msra.mxu0 %v468
    %702 = vmatpush.bf16.msra.mxu0 %v465
    %703 = vmatmul.bf16.gmra.mxu0 %v694
    %v704 = vpop.f32.mrf.mxu0
    %v705 = vadd.f32 %v379, %v704
    %v706 = vpop.f32.mrf.mxu0
    %v707 = vadd.f32 %v379, %v706
    %708 = vdwg.mxu0
    %709 = vmatpush.bf16.msra.mxu0 %v487
    %710 = vmatpush.bf16.msra.mxu0 %v484
    %711 = vmatpush.bf16.msra.mxu0 %v481
    %712 = vmatpush.bf16.msra.mxu0 %v478
    %713 = vmatpush.bf16.msra.mxu0 %v475
    %714 = vmatpush.bf16.msra.mxu0 %v472
    %715 = vmatpush.bf16.msra.mxu0 %v469
    %716 = vmatpush.bf16.msra.mxu0 %v466
    %717 = vmatmul.bf16.gmra.mxu0 %v694
    %v718 = vpop.f32.mrf.mxu0
    %v719 = vadd.f32 %v380, %v718
    %v720 = vpop.f32.mrf.mxu0
    %v721 = vadd.f32 %v380, %v720
    %722 = vdwg.mxu0
    %723 = vmatpush.bf16.msra.mxu0 %v488
    %724 = vmatpush.bf16.msra.mxu0 %v485
    %725 = vmatpush.bf16.msra.mxu0 %v482
    %726 = vmatpush.bf16.msra.mxu0 %v479
    %727 = vmatpush.bf16.msra.mxu0 %v476
    %728 = vmatpush.bf16.msra.mxu0 %v473
    %729 = vmatpush.bf16.msra.mxu0 %v470
    %730 = vmatpush.bf16.msra.mxu0 %v467
    %731 = vmatmul.bf16.gmra.mxu0 %v694
    %v732 = vpop.f32.mrf.mxu0
    %v733 = vadd.f32 %v381, %v732
    %v734 = vpop.f32.mrf.mxu0
    %v735 = vadd.f32 %v381, %v734
    %736 = vdwg.mxu0
    %v737 = vadd.f32 %v662, %v705
    %v738 = vadd.f32 %v664, %v707
    %v739 = vxor.u32 %v737, 2147483648
    %v740 = vxor.u32 %v738, 2147483648
    %v741 = vmul.f32 %v739, 1.442695
    %v742 = vpow.pop %v741
    %v743 = vmul.f32 %v740, 1.442695
    %v744 = vpow.pop %v743
    %v745 = vadd.f32 %v742, 1.0
    %v746 = vadd.f32 %v744, 1.0
    %v747 = vrcp.pop %v745
    %v748 = vmul.f32 %v745, %v747
    %v749 = vsub.f32 1.0, %v748
    %v750 = vmul.f32 %v747, %v749
    %v751 = vadd.f32 %v747, %v750
    %vm752 = vweird.f32 %v745
    %vm753 = vweird.f32 %v747
    %vm754 = vmor %vm752, %vm753
    %v755 = vsel %vm754, %v747, %v751
    %v756 = vand.u32 2147483647, %v745
    %vm757 = vcmp.eq.f32.partialorder %v756, 8.507059e+37
    %v758 = vand.u32 %v745, 2147483648
    %v759 = vor.u32 1.1754944e-38, %v758
    %v760 = vsel %vm757, %v759, %v755
    %v761 = vmul.f32 1.0, %v760
    %v762 = vrcp.pop %v746
    %v763 = vmul.f32 %v746, %v762
    %v764 = vsub.f32 1.0, %v763
    %v765 = vmul.f32 %v762, %v764
    %v766 = vadd.f32 %v762, %v765
    %vm767 = vweird.f32 %v746
    %vm768 = vweird.f32 %v762
    %vm769 = vmor %vm767, %vm768
    %v770 = vsel %vm769, %v762, %v766
    %v771 = vand.u32 2147483647, %v746
    %vm772 = vcmp.eq.f32.partialorder %v771, 8.507059e+37
    %v773 = vand.u32 %v746, 2147483648
    %v774 = vor.u32 1.1754944e-38, %v773
    %v775 = vsel %vm772, %v774, %v770
    %v776 = vmul.f32 1.0, %v775
    %v777 = vadd.f32 %v676, %v719
    %v778 = vadd.f32 %v678, %v721
    %v779 = vxor.u32 %v777, 2147483648
    %v780 = vxor.u32 %v778, 2147483648
    %v781 = vmul.f32 %v779, 1.442695
    %v782 = vpow.pop %v781
    %v783 = vmul.f32 %v780, 1.442695
    %v784 = vpow.pop %v783
    %v785 = vadd.f32 %v782, 1.0
    %v786 = vadd.f32 %v784, 1.0
    %v787 = vrcp.pop %v785
    %v788 = vmul.f32 %v785, %v787
    %v789 = vsub.f32 1.0, %v788
    %v790 = vmul.f32 %v787, %v789
    %v791 = vadd.f32 %v787, %v790
    %vm792 = vweird.f32 %v785
    %vm793 = vweird.f32 %v787
    %vm794 = vmor %vm792, %vm793
    %v795 = vsel %vm794, %v787, %v791
    %v796 = vand.u32 2147483647, %v785
    %vm797 = vcmp.eq.f32.partialorder %v796, 8.507059e+37
    %v798 = vand.u32 %v785, 2147483648
    %v799 = vor.u32 1.1754944e-38, %v798
    %v800 = vsel %vm797, %v799, %v795
    %v801 = vmul.f32 1.0, %v800
    %v802 = vrcp.pop %v786
    %v803 = vmul.f32 %v786, %v802
    %v804 = vsub.f32 1.0, %v803
    %v805 = vmul.f32 %v802, %v804
    %v806 = vadd.f32 %v802, %v805
    %vm807 = vweird.f32 %v786
    %vm808 = vweird.f32 %v802
    %vm809 = vmor %vm807, %vm808
    %v810 = vsel %vm809, %v802, %v806
    %v811 = vand.u32 2147483647, %v786
    %vm812 = vcmp.eq.f32.partialorder %v811, 8.507059e+37
    %v813 = vand.u32 %v786, 2147483648
    %v814 = vor.u32 1.1754944e-38, %v813
    %v815 = vsel %vm812, %v814, %v810
    %v816 = vmul.f32 1.0, %v815
    %v817 = vmul.f32 %v761, %v733
    %v818 = vmul.f32 %v776, %v735
    %v819 = vadd.f32 %v690, %v817
    %v820 = vadd.f32 %v692, %v818
    %v821 = vtanh.pop %v819
    %v822 = vtanh.pop %v820
    %v823 = vsub.f32 1.0, %v801
    %v824 = vsub.f32 1.0, %v816
    %v825 = vmul.f32 %v823, %v821
    %v826 = vmul.f32 %v824, %v822
    %v827 = vmul.f32 %v801, %v647
    %v828 = vmul.f32 %v816, %v648
    %v829 = vadd.f32 %v825, %v827
    %v830 = vadd.f32 %v826, %v828
    %v831 = vld [vmem:[#allocation11] sm:$0xff]
    %v832 = vld [vmem:[#allocation11 + $0x8] sm:$0xff]
    %v833 = vld [vmem:[#allocation11 + $0x10] sm:$0xff]
    %v834 = vld [vmem:[#allocation11 + $0x18] sm:$0xff]
    %v835 = vld [vmem:[#allocation11 + $0x20] sm:$0xff]
    %v836 = vld [vmem:[#allocation11 + $0x28] sm:$0xff]
    %v837 = vld [vmem:[#allocation11 + $0x30] sm:$0xff]
    %v838 = vld [vmem:[#allocation11 + $0x38] sm:$0xff]
    %v839 = vld [vmem:[#allocation11 + $0x40] sm:$0xff]
    %v840 = vld [vmem:[#allocation11 + $0x48] sm:$0xff]
    %v841 = vld [vmem:[#allocation11 + $0x50] sm:$0xff]
    %v842 = vld [vmem:[#allocation11 + $0x58] sm:$0xff]
    %v843 = vld [vmem:[#allocation11 + $0x60] sm:$0xff]
    %v844 = vld [vmem:[#allocation11 + $0x68] sm:$0xff]
    %v845 = vld [vmem:[#allocation11 + $0x70] sm:$0xff]
    %v846 = vld [vmem:[#allocation11 + $0x78] sm:$0xff]
    %v847 = vld [vmem:[#allocation11 + $0x80] sm:$0xff]
    %v848 = vld [vmem:[#allocation11 + $0x88] sm:$0xff]
    %v849 = vld [vmem:[#allocation11 + $0x90] sm:$0xff]
    %v850 = vld [vmem:[#allocation11 + $0x98] sm:$0xff]
    %v851 = vld [vmem:[#allocation11 + $0xa0] sm:$0xff]
    %v852 = vld [vmem:[#allocation11 + $0xa8] sm:$0xff]
    %v853 = vld [vmem:[#allocation11 + $0xb0] sm:$0xff]
    %v854 = vld [vmem:[#allocation11 + $0xb8] sm:$0xff]
    %v855 = vld [vmem:[#allocation11 + $0xc0] sm:$0xff]
    %v856 = vld [vmem:[#allocation11 + $0xc8] sm:$0xff]
    %v857 = vld [vmem:[#allocation11 + $0xd0] sm:$0xff]
    %v858 = vld [vmem:[#allocation11 + $0xd8] sm:$0xff]
    %v859 = vld [vmem:[#allocation11 + $0xe0] sm:$0xff]
    %v860 = vld [vmem:[#allocation11 + $0xe8] sm:$0xff]
    %v861 = vld [vmem:[#allocation11 + $0xf0] sm:$0xff]
    %v862 = vld [vmem:[#allocation11 + $0xf8] sm:$0xff]
    %v863 = vld [vmem:[%s7] sm:$0x3]
    %v865 = vperm.slane %v863, 0
    %v866 = vperm.slane %v863, 1
    %869 = vmatpush.msra.mxu0 %v861
    %870 = vmatpush.msra.mxu0 %v859
    %871 = vmatpush.msra.mxu0 %v857
    %872 = vmatpush.msra.mxu0 %v855
    %873 = vmatpush.msra.mxu0 %v853
    %874 = vmatpush.msra.mxu0 %v851
    %875 = vmatpush.msra.mxu0 %v849
    %876 = vmatpush.msra.mxu0 %v847
    %877 = vmatpush.msra.mxu0 %v845
    %878 = vmatpush.msra.mxu0 %v843
    %879 = vmatpush.msra.mxu0 %v841
    %880 = vmatpush.msra.mxu0 %v839
    %881 = vmatpush.msra.mxu0 %v837
    %882 = vmatpush.msra.mxu0 %v835
    %883 = vmatpush.msra.mxu0 %v833
    %884 = vmatpush.msra.mxu0 %v831
    %885 = vmatmul.f32.gmra.mxu0 %v829
    %v886 = vpop.f32.mrf.mxu0
    %v887 = vadd.f32 %v865, %v886
    %888 = vmatmul.f32.gmra.mxu0 %v830
    %v889 = vpop.f32.mrf.mxu0
    %v890 = vadd.f32 %v865, %v889
    %891 = vdwg.mxu0
    %892 = vmatpush.msra.mxu0 %v862
    %893 = vmatpush.msra.mxu0 %v860
    %894 = vmatpush.msra.mxu0 %v858
    %895 = vmatpush.msra.mxu0 %v856
    %896 = vmatpush.msra.mxu0 %v854
    %897 = vmatpush.msra.mxu0 %v852
    %898 = vmatpush.msra.mxu0 %v850
    %899 = vmatpush.msra.mxu0 %v848
    %900 = vmatpush.msra.mxu0 %v846
    %901 = vmatpush.msra.mxu0 %v844
    %902 = vmatpush.msra.mxu0 %v842
    %903 = vmatpush.msra.mxu0 %v840
    %904 = vmatpush.msra.mxu0 %v838
    %905 = vmatpush.msra.mxu0 %v836
    %906 = vmatpush.msra.mxu0 %v834
    %907 = vmatpush.msra.mxu0 %v832
    %908 = vmatmul.f32.gmra.mxu0 %v829
    %v909 = vpop.f32.mrf.mxu0
    %v910 = vadd.f32 %v866, %v909
    %911 = vmatmul.f32.gmra.mxu0 %v830
    %v912 = vpop.f32.mrf.mxu0
    %v913 = vadd.f32 %v866, %v912
    %914 = vdwg.mxu0
    %v915 = vmax.f32 %v887, %v910
    %916 = vmax.xlane.f32.xlu0 %v915
    %v917 = vpop.xlane.xlu0 %916
    %v918 = vmax.f32 %v890, %v913
    %919 = vmax.xlane.f32.xlu0 %v918
    %v920 = vpop.xlane.xlu0 %919
    %v921 = vsub.f32 %v887, %v917
    %v922 = vsub.f32 %v910, %v917
    %v923 = vsub.f32 %v890, %v920
    %v924 = vsub.f32 %v913, %v920
    %v925 = vmul.f32 %v921, 1.442695
    %v926 = vpow.pop %v925
    %v927 = vmul.f32 %v922, 1.442695
    %v928 = vpow.pop %v927
    %v929 = vmul.f32 %v923, 1.442695
    %v930 = vpow.pop %v929
    %v931 = vmul.f32 %v924, 1.442695
    %v932 = vpow.pop %v931
    %v933 = vadd.f32 %v926, %v928
    %934 = vadd.xlane.f32.xlu0 %v933
    %v935 = vpop.xlane.xlu0 %934
    %v936 = vadd.f32 %v930, %v932
    %937 = vadd.xlane.f32.xlu0 %v936
    %v938 = vpop.xlane.xlu0 %937
    %v939 = vlog2.pop %v935
    %v940 = vmul.f32 %v939, 0.6931472
    %v941 = vlog2.pop %v938
    %v942 = vmul.f32 %v941, 0.6931472
    %v943 = vsub.f32 %v921, %v940
    %v944 = vsub.f32 %v922, %v940
    %v945 = vsub.f32 %v923, %v942
    %v946 = vsub.f32 %v924, %v942
    %947 = vst [vmem:[#allocation13] sm:$0xff] %v943
    %948 = vst [vmem:[#allocation13 + $0x8] sm:$0xff] %v944
    %949 = vst [vmem:[#allocation13 + $0x10] sm:$0xff] %v945
    %950 = vst [vmem:[#allocation13 + $0x18] sm:$0xff] %v946
    %951 = vst [vmem:[#allocation14] sm:$0xff] %v829
    %952 = vst [vmem:[#allocation14 + $0x8] sm:$0xff] %v830
    // Predicated region
    $region58: #{tpu_custom_call.1} parent=1 // pred_check
      _
    $region59: #{tpu_custom_call.1} parent=1 // pred_check_branch
      %954 = sbr.rel (0) target = $region61
    $region60: #{tpu_custom_call.1} parent=1 // pred_region
      %956 = vsyncadd [#allocation4], 0
      %s957 = sshll.u32 [#allocation13], 4
      %s958 = int_to_ptr.vmem [resolvable:$true] %s957
      %s959 = sshll.u32 %s8, 4
      %s960 = int_to_ptr.hbm [resolvable:$true] %s959
      %965 = dma.vmem_to_hbm [thread:$0]  %s958, 512, %s960, [#allocation4], 256, 256, 16
    $region61: #{tpu_custom_call.1} parent=1 // pred_fallthru
      _
    // Predicated region
    $region62: #{tpu_custom_call.1} parent=1 // pred_check
      _
    $region63: #{tpu_custom_call.1} parent=1 // pred_check_branch
      %967 = sbr.rel (0) target = $region65
    $region64: #{tpu_custom_call.1} parent=1 // pred_region
      %969 = vsyncadd [#allocation15], 0
      %s970 = sshll.u32 [#allocation14], 4
      %s971 = int_to_ptr.vmem [resolvable:$true] %s970
      %s972 = sshll.u32 %s9, 4
      %s973 = int_to_ptr.hbm [resolvable:$true] %s972
      %978 = dma.vmem_to_hbm [thread:$0]  %s971, 256, %s973, [#allocation15], 128, 128, 8
    $region65: #{tpu_custom_call.1} parent=1 // pred_fallthru
      _
    // Predicated region
    $region66: #{tpu_custom_call.1} parent=1 // pred_check
      _
    $region67: #{tpu_custom_call.1} parent=1 // pred_check_branch
      %980 = sbr.rel (0) target = $region69
    $region68: #{tpu_custom_call.1} parent=1 // pred_region
      %982 = dma.done [#allocation4], 512
    $region69: #{tpu_custom_call.1} parent=1 // pred_fallthru
      _
    // Predicated region
    $region70: #{tpu_custom_call.1} parent=1 // pred_check
      _
    $region71: #{tpu_custom_call.1} parent=1 // pred_check_branch
      %984 = sbr.rel (0) target = $region73
    $region72: #{tpu_custom_call.1} parent=1 // pred_region
      %986 = dma.done [#allocation15], 256
    $region73: #{tpu_custom_call.1} parent=1 // pred_fallthru
      _
    %987 = vsyncpa [#allocation3], 1
    %988 = vsyncpa [#allocation6], 1
    %989 = vsyncpa [#allocation9], 1
    %990 = vsyncpa [#allocation12], 1
    %991 = vsyncpa [#allocation4], 1
    %992 = vsyncpa [#allocation15], 1

</llo_original>
